<compile_context>
chip_gen: v5e
topology: v5e:2x2
jax: 0.10.0
libtpu: 0.0.40
codegen_flags: <defaults>
</compile_context>

<pallas_src>
import jax
import jax.numpy as jnp
from jax.experimental import pallas as pl
from jax.experimental.pallas import tpu as pltpu


def _round_up(n, m):
    return ((n + m - 1) // m) * m


def _make_kernel(E, fuse):
    """Returns the kernel body; `E`/`fuse` are trace-time constants."""

    def kernel(enc_ref, dec_ref, w1_ref, b1_ref, w2_ref, b2_ref, o_ref):
        enc = enc_ref[...]                       # (tn, E) f32
        dec = dec_ref[...]                       # (tn, E) f32

        # sigmoid(z) = 0.5 * (1 + tanh(z / 2)) -- single EUP tanh push.
        gate = 0.5 * (1.0 + jnp.tanh(0.5 * dec))
        x = enc * gate

        xb = x.astype(jnp.bfloat16)
        eb = enc.astype(jnp.bfloat16)
        db = dec.astype(jnp.bfloat16)

        if fuse:
            # One (tn, 3E) x (3E, E) matmul: a single MXU K-pass, one weight
            # load, ~3x fewer vmatmul pushes than three separate dots.
            cat = jnp.concatenate([xb, eb, db], axis=-1)          # (tn, 3E)
            h = jnp.dot(cat, w1_ref[...],
                        preferred_element_type=jnp.float32)
        else:
            # Large E: keep the 3-way split (identical math, no lane concat).
            h = (jnp.dot(xb, w1_ref[0:E, :],
                         preferred_element_type=jnp.float32)
                 + jnp.dot(eb, w1_ref[E:2 * E, :],
                           preferred_element_type=jnp.float32)
                 + jnp.dot(db, w1_ref[2 * E:3 * E, :],
                           preferred_element_type=jnp.float32))

        h = h + b1_ref[...]

        # tanh-approx GELU (see TODO above).
        h = 0.5 * h * (1.0 + jnp.tanh(0.7978845608028654
                                      * (h + 0.044715 * h * h * h)))

        # classfier_2: E -> 1 projection on the VPU + lane reduce.
        y = jnp.sum(h * w2_ref[...], axis=-1, keepdims=True) + b2_ref[0, 0]
        o_ref[...] = y

    return kernel


def _choose_row_tile(N, E, *, tile_cap, vmem_budget_bytes):
    """Largest row tile whose double-buffered working set fits the budget."""
    weight_bytes = 3 * E * E * 2 + 2 * E * 4 + 256       # W1 (bf16) + b1 + w2
    budget = max(vmem_budget_bytes - weight_bytes, 1 << 20)
    # Per-row cost: 2 f32 activation streams x 2 buffers + (tn,1) f32 output
    # buffers lane-padded to 128 lanes x 2 buffers.
    per_row = 2 * 2 * E * 4 + 2 * 128 * 4
    tn = budget // per_row
    tn = max(8, min(tile_cap, tn))
    tn = (tn // 8) * 8                                    # sublane granule
    tn = min(tn, _round_up(N, 8))                         # don't exceed problem
    return max(tn, 8)


def out_module_forward(encoder, decoder, params, *, tile_n=4096,
                       vmem_budget_bytes=24 * 1024 * 1024):
    """encoder, decoder: [B, S, E] float32. Returns [B, S, 1] float32."""
    B, S, E = encoder.shape
    N = B * S

    # No pad, no dtype convert in the wrapper: feed f32 rows straight in.
    enc2d = encoder.reshape(N, E)
    dec2d = decoder.reshape(N, E)

    w1 = params["w1"].astype(jnp.bfloat16)                 # [3E, E]
    b1 = params["b1"].reshape(1, E).astype(jnp.float32)    # [1, E]
    w2 = params["w2"].reshape(1, E).astype(jnp.float32)    # [1, E] (VPU row)
    b2 = params["b2"].reshape(1, 1).astype(jnp.float32)    # [1, 1] SMEM scalar

    tn = _choose_row_tile(N, E, tile_cap=tile_n,
                          vmem_budget_bytes=vmem_budget_bytes)
    grid = (pl.cdiv(N, tn),)

    # Fuse into a single K=3E matmul only while it is one MXU K-pass on every
    # generation (v5e MXU is 128 deep); otherwise use the 3-way split.
    fuse = (3 * E) <= 128

    row_spec = pl.BlockSpec((tn, E), lambda i: (i, 0))

    def resident(shape):
        return pl.BlockSpec(shape, lambda i: (0, 0))

    cost = pl.CostEstimate(
        flops=2 * N * (3 * E) * E + 2 * N * E,
        transcendentals=2 * N * E,
        bytes_accessed=2 * N * E * 4 + 3 * E * E * 2 + (2 * E + 1) * 4 + N * 4,
    )

    out2d = pl.pallas_call(
        _make_kernel(E, fuse),
        out_shape=jax.ShapeDtypeStruct((N, 1), jnp.float32),
        grid=grid,
        in_specs=[
            row_spec,                                            # encoder tile
            row_spec,                                            # decoder tile
            resident((3 * E, E)),                                # W1 (resident)
            resident((1, E)),                                    # b1
            resident((1, E)),                                    # w2 row
            pl.BlockSpec(memory_space=pltpu.MemorySpace.SMEM),   # b2 scalar
        ],
        out_specs=pl.BlockSpec((tn, 1), lambda i: (i, 0)),
        compiler_params=pltpu.CompilerParams(
            dimension_semantics=("parallel",),
            vmem_limit_bytes=32 * 1024 * 1024,
        ),
        cost_estimate=cost,
    )(enc2d, dec2d, w1, b1, w2, b2)

    return out2d.reshape(B, S, 1)


def out_module_reference(encoder, decoder, params):
    """Pure-JAX f32 reference (tanh-GELU, same math as the PyTorch module)."""
    x = encoder * jax.nn.sigmoid(decoder)
    cat = jnp.concatenate([x, encoder, decoder], axis=-1)
    h = cat @ params["w1"] + params["b1"]
    h = 0.5 * h * (1.0 + jnp.tanh(0.7978845608028654
                                  * (h + 0.044715 * h * h * h)))
    return h @ params["w2"] + params["b2"]


def init_params(key, embedding_dim):
    """Deterministic init matching nn.Linear shapes (weights stored transposed)."""
    E = embedding_dim
    k1, k2, k3, k4 = jax.random.split(key, 4)
    # classfier_1: Linear(3E -> E): torch weight [E, 3E] -> stored [3E, E].
    bound1 = 1.0 / jnp.sqrt(3.0 * E)
    w1 = jax.random.uniform(k1, (3 * E, E), jnp.float32, -bound1, bound1)
    b1 = jax.random.uniform(k2, (E,), jnp.float32, -bound1, bound1)
    # classfier_2: Linear(E -> 1): torch weight [1, E] -> stored [E, 1].
    bound2 = 1.0 / jnp.sqrt(float(E))
    w2 = jax.random.uniform(k3, (E, 1), jnp.float32, -bound2, bound2)
    b2 = jax.random.uniform(k4, (1,), jnp.float32, -bound2, bound2)
    return {"w1": w1, "b1": b1, "w2": w2, "b2": b2}


if __name__ == "__main__":
    B, S, E = 2, 8, 32
    key = jax.random.PRNGKey(0)
    k_enc, k_dec, k_par = jax.random.split(key, 3)

    encoder = jax.random.normal(k_enc, (B, S, E), jnp.float32)
    decoder = jax.random.normal(k_dec, (B, S, E), jnp.float32)
    params = init_params(k_par, E)

    out = out_module_forward(encoder, decoder, params)
    jax.block_until_ready(out)
    assert out.shape == (B, S, 1), out.shape

    ref = out_module_reference(encoder, decoder, params)
    err = float(jnp.max(jnp.abs(out - ref)))
    assert err < 5e-2, f"max abs error vs reference: {err}"
    print("KERNEL_OK")
</pallas_src>

<mosaic_0001>
module attributes {stable_mosaic.version = 11 : i64} {
  func.func @kernel(%arg0: i32, %arg1: memref<16x32xf32, #tpu.memory_space<vmem>>, %arg2: memref<16x32xf32, #tpu.memory_space<vmem>>, %arg3: memref<96x32xbf16, #tpu.memory_space<vmem>>, %arg4: memref<1x32xf32, #tpu.memory_space<vmem>>, %arg5: memref<1x32xf32, #tpu.memory_space<vmem>>, %arg6: memref<1x1xf32, #tpu.memory_space<smem>>, %arg7: memref<16x1xf32, #tpu.memory_space<vmem>>) attributes {dimension_semantics = [#tpu.dimension_semantics<parallel>], iteration_bounds = array<i64: 1>, scalar_prefetch = 0 : i64, scratch_operands = 0 : i64, tpu.core_type = #tpu.core_type<tc>, window_params = [{transform_indices = @transform_0, window_bounds = array<i64: 16, 32>}, {transform_indices = @transform_1, window_bounds = array<i64: 16, 32>}, {pipeline_mode = #tpu.pipeline_mode<synchronous>, transform_indices = @transform_2, window_bounds = array<i64: 96, 32>}, {pipeline_mode = #tpu.pipeline_mode<synchronous>, transform_indices = @transform_3, window_bounds = array<i64: 1, 32>}, {pipeline_mode = #tpu.pipeline_mode<synchronous>, transform_indices = @transform_4, window_bounds = array<i64: 1, 32>}, {transform_indices = @transform_5, window_bounds = array<i64: 1, 1>}, {transform_indices = @transform_6, window_bounds = array<i64: 16, 1>}]} {
    %c0 = arith.constant 0 : index
    %c0_0 = arith.constant 0 : index
    %0 = vector.load %arg1[%c0, %c0_0] : memref<16x32xf32, #tpu.memory_space<vmem>>, vector<16x32xf32>
    %c0_1 = arith.constant 0 : index
    %c0_2 = arith.constant 0 : index
    %1 = vector.load %arg2[%c0_1, %c0_2] : memref<16x32xf32, #tpu.memory_space<vmem>>, vector<16x32xf32>
    %cst = arith.constant 5.000000e-01 : f32
    %2 = vector.broadcast %cst : f32 to vector<16x32xf32>
    %3 = arith.mulf %2, %1 : vector<16x32xf32>
    %4 = math.tanh %3 : vector<16x32xf32>
    %cst_3 = arith.constant 1.000000e+00 : f32
    %5 = vector.broadcast %cst_3 : f32 to vector<16x32xf32>
    %6 = arith.addf %5, %4 : vector<16x32xf32>
    %cst_4 = arith.constant 5.000000e-01 : f32
    %7 = vector.broadcast %cst_4 : f32 to vector<16x32xf32>
    %8 = arith.mulf %7, %6 : vector<16x32xf32>
    %9 = arith.mulf %0, %8 : vector<16x32xf32>
    %10 = arith.truncf %9 : vector<16x32xf32> to vector<16x32xbf16>
    %11 = arith.truncf %0 : vector<16x32xf32> to vector<16x32xbf16>
    %12 = arith.truncf %1 : vector<16x32xf32> to vector<16x32xbf16>
    %13 = tpu.concatenate %10, %11, %12 in 1 : vector<16x32xbf16>, vector<16x32xbf16>, vector<16x32xbf16> -> vector<16x96xbf16>
    %c0_5 = arith.constant 0 : index
    %c0_6 = arith.constant 0 : index
    %14 = vector.load %arg3[%c0_5, %c0_6] : memref<96x32xbf16, #tpu.memory_space<vmem>>, vector<96x32xbf16>
    %cst_7 = arith.constant dense<0.000000e+00> : vector<16x32xf32>
    %15 = tpu.matmul %13, %14, %cst_7 {dimension_numbers = #tpu.dot_dimension_numbers<[1], [0], [0], [1], [0, 0, 1, 1], [], []>} : vector<16x96xbf16>, vector<96x32xbf16>, vector<16x32xf32> -> vector<16x32xf32>
    %c0_8 = arith.constant 0 : index
    %c0_9 = arith.constant 0 : index
    %16 = vector.load %arg4[%c0_8, %c0_9] : memref<1x32xf32, #tpu.memory_space<vmem>>, vector<1x32xf32>
    %17 = vector.broadcast %16 : vector<1x32xf32> to vector<16x32xf32>
    %18 = arith.addf %15, %17 : vector<16x32xf32>
    %cst_10 = arith.constant 5.000000e-01 : f32
    %19 = vector.broadcast %cst_10 : f32 to vector<16x32xf32>
    %20 = arith.mulf %19, %18 : vector<16x32xf32>
    %cst_11 = arith.constant 4.471500e-02 : f32
    %21 = vector.broadcast %cst_11 : f32 to vector<16x32xf32>
    %22 = arith.mulf %21, %18 : vector<16x32xf32>
    %23 = arith.mulf %22, %18 : vector<16x32xf32>
    %24 = arith.mulf %23, %18 : vector<16x32xf32>
    %25 = arith.addf %18, %24 : vector<16x32xf32>
    %cst_12 = arith.constant 0.797884583 : f32
    %26 = vector.broadcast %cst_12 : f32 to vector<16x32xf32>
    %27 = arith.mulf %26, %25 : vector<16x32xf32>
    %28 = math.tanh %27 : vector<16x32xf32>
    %cst_13 = arith.constant 1.000000e+00 : f32
    %29 = vector.broadcast %cst_13 : f32 to vector<16x32xf32>
    %30 = arith.addf %29, %28 : vector<16x32xf32>
    %31 = arith.mulf %20, %30 : vector<16x32xf32>
    %c0_14 = arith.constant 0 : index
    %c0_15 = arith.constant 0 : index
    %32 = vector.load %arg5[%c0_14, %c0_15] : memref<1x32xf32, #tpu.memory_space<vmem>>, vector<1x32xf32>
    %33 = vector.broadcast %32 : vector<1x32xf32> to vector<16x32xf32>
    %34 = arith.mulf %31, %33 : vector<16x32xf32>
    %cst_16 = arith.constant dense<0.000000e+00> : vector<16xf32>
    %35 = vector.multi_reduction <add>, %34, %cst_16 [1] : vector<16x32xf32> to vector<16xf32>
    %36 = vector.shape_cast %35 : vector<16xf32> to vector<16x1xf32>
    %c0_17 = arith.constant 0 : index
    %c0_18 = arith.constant 0 : index
    %37 = memref.load %arg6[%c0_17, %c0_18] : memref<1x1xf32, #tpu.memory_space<smem>>
    %38 = vector.broadcast %37 : f32 to vector<16x1xf32>
    %39 = arith.addf %36, %38 : vector<16x1xf32>
    %c0_19 = arith.constant 0 : index
    %c0_20 = arith.constant 0 : index
    %40 = vector.load %arg7[%c0_19, %c0_20] : memref<16x1xf32, #tpu.memory_space<vmem>>, vector<16x1xf32>
    tpu.vector_store %arg7[%c0_19, %c0_20], %39 {strides = array<i32>} : memref<16x1xf32, #tpu.memory_space<vmem>>, vector<16x1xf32>,
    return
  }
  func.func @transform_0(%arg0: i32) -> (i32, i32) {
    %c0_i32 = arith.constant 0 : i32
    %c0_i32_0 = arith.constant 0 : i32
    return %arg0, %c0_i32 : i32, i32
  }
  func.func @transform_1(%arg0: i32) -> (i32, i32) {
    %c0_i32 = arith.constant 0 : i32
    %c0_i32_0 = arith.constant 0 : i32
    return %arg0, %c0_i32 : i32, i32
  }
  func.func @transform_2(%arg0: i32) -> (i32, i32) {
    %c0_i32 = arith.constant 0 : i32
    %c0_i32_0 = arith.constant 0 : i32
    %c0_i32_1 = arith.constant 0 : i32
    return %c0_i32, %c0_i32_0 : i32, i32
  }
  func.func @transform_3(%arg0: i32) -> (i32, i32) {
    %c0_i32 = arith.constant 0 : i32
    %c0_i32_0 = arith.constant 0 : i32
    %c0_i32_1 = arith.constant 0 : i32
    return %c0_i32, %c0_i32_0 : i32, i32
  }
  func.func @transform_4(%arg0: i32) -> (i32, i32) {
    %c0_i32 = arith.constant 0 : i32
    %c0_i32_0 = arith.constant 0 : i32
    %c0_i32_1 = arith.constant 0 : i32
    return %c0_i32, %c0_i32_0 : i32, i32
  }
  func.func @transform_5(%arg0: i32) -> (i32, i32) {
    %c0_i32 = arith.constant 0 : i32
    %c0_i32_0 = arith.constant 0 : i32
    %c0_i32_1 = arith.constant 0 : i32
    return %c0_i32, %c0_i32_0 : i32, i32
  }
  func.func @transform_6(%arg0: i32) -> (i32, i32) {
    %c0_i32 = arith.constant 0 : i32
    %c0_i32_0 = arith.constant 0 : i32
    return %arg0, %c0_i32 : i32, i32
  }
}

</mosaic_0001>

<llo_original>
// kernel: tpu_custom_call.1
$region0: #{tpu_custom_call.1}
  #allocation0 [shape = 'u32[]', space=smem, size = 0x4, offset = 0x4, fixed_abs, tag = 'smem constant byte address 0x4 - core index']
  #allocation1 [shape = 'u32[72,128]{1,0:T(1,128)}', space=vmem, size = 0x9000, scoped, tag = 'internal scratch']
  #allocation2 [shape = 'f32[1,1]{1,0:T(1,128)S(6)}', space=smem, size = 0x200, scoped, tag = 'scoped memory for tpu_custom_call.1']
  %s0 = inlined_call_operand.vmem [shape: f32[16,32], index: 0, kind: input, shape index: {}]
  %s1 = inlined_call_operand.vmem [shape: f32[16,32], index: 1, kind: input, shape index: {}]
  %s2 = inlined_call_operand.vmem [shape: bf16[96,32], index: 2, kind: input, shape index: {}]
  %s3 = inlined_call_operand.vmem [shape: f32[1,32], index: 3, kind: input, shape index: {}]
  %s4 = inlined_call_operand.vmem [shape: f32[1,32], index: 4, kind: input, shape index: {}]
  %s5 = inlined_call_operand.<no memory space> [shape: f32[1,1], index: 5, kind: input, shape index: {}]
  %s6 = inlined_call_operand.vmem [shape: f32[16,1], index: 6, kind: output, shape index: {}]
  %s7 = sld [smem:[#allocation0]]
  $region34: #{tpu_custom_call.1} parent=0
    _
  %s9 = ssub.s32 1, %s7
  %s10 = scalar_select 0, %s9, %s7
  %11 = sst [smem:[#allocation2]] %s5
  // Predicated region
  $region2: #{tpu_custom_call.1} parent=0 // pred_check
    _
  $region3: #{tpu_custom_call.1} parent=0 // pred_check_branch
    %13 = sbr.rel (0) target = $region5
  $region4: #{tpu_custom_call.1} parent=0 // pred_region
    _
  $region5: #{tpu_custom_call.1} parent=0 // pred_fallthru
    _
  // Predicated region
  $region6: #{tpu_custom_call.1} parent=0 // pred_check
    _
  $region7: #{tpu_custom_call.1} parent=0 // pred_check_branch
    %15 = sbr.rel (0) target = $region9
  $region8: #{tpu_custom_call.1} parent=0 // pred_region
    _
  $region9: #{tpu_custom_call.1} parent=0 // pred_fallthru
    _
  // Predicated region
  $region10: #{tpu_custom_call.1} parent=0 // pred_check
    _
  $region11: #{tpu_custom_call.1} parent=0 // pred_check_branch
    %17 = sbr.rel (0) target = $region13
  $region12: #{tpu_custom_call.1} parent=0 // pred_region
    _
  $region13: #{tpu_custom_call.1} parent=0 // pred_fallthru
    _
  // Predicated region
  $region14: #{tpu_custom_call.1} parent=0 // pred_check
    _
  $region15: #{tpu_custom_call.1} parent=0 // pred_check_branch
    %19 = sbr.rel (0) target = $region17
  $region16: #{tpu_custom_call.1} parent=0 // pred_region
    _
  $region17: #{tpu_custom_call.1} parent=0 // pred_fallthru
    _
  // Predicated region
  $region18: #{tpu_custom_call.1} parent=0 // pred_check
    _
  $region19: #{tpu_custom_call.1} parent=0 // pred_check_branch
    %21 = sbr.rel (0) target = $region21
  $region20: #{tpu_custom_call.1} parent=0 // pred_region
    _
  $region21: #{tpu_custom_call.1} parent=0 // pred_fallthru
    _
  // Predicated region
  $region22: #{tpu_custom_call.1} parent=0 // pred_check
    _
  $region23: #{tpu_custom_call.1} parent=0 // pred_check_branch
    %23 = sbr.rel (0) target = $region25
  $region24: #{tpu_custom_call.1} parent=0 // pred_region
    _
  $region25: #{tpu_custom_call.1} parent=0 // pred_fallthru
    _
  %v25 = vld [vmem:[%s0] sm:$0xff]
  %v26 = vld [vmem:[%s0 + $0x8] sm:$0xff]
  %v27 = vld [vmem:[%s1] sm:$0xff]
  %v28 = vld [vmem:[%s1 + $0x8] sm:$0xff]
  %v29 = vmul.f32 %v27, 0.5
  %v30 = vmul.f32 %v28, 0.5
  %v31 = vtanh.pop %v29
  %v32 = vtanh.pop %v30
  %v33 = vadd.f32 %v31, 1.0
  %v34 = vadd.f32 %v32, 1.0
  %v35 = vmul.f32 %v33, 0.5
  %v36 = vmul.f32 %v34, 0.5
  %v37 = vmul.f32 %v25, %v35
  %v38 = vmul.f32 %v26, %v36
  %v39 = vpack.c.bf16 %v37, %v37
  %v40 = vpack.c.bf16 %v38, %v38
  %v41 = vpack.c.bf16 %v25, %v25
  %v42 = vpack.c.bf16 %v26, %v26
  %v43 = vpack.c.bf16 %v27, %v27
  %v44 = vpack.c.bf16 %v28, %v28
  %v47 = vunpack.c.l.b16 %v39
  %v48 = vunpack.c.l.b16 %v40
  %v49 = vpack.c.b16 %v48, %v47
  %v52 = vunpack.c.l.b16 %v41
  %v53 = vunpack.c.l.b16 %v42
  %v54 = vpack.c.b16 %v53, %v52
  %55 = vrot.lane.b32.xlu0 %v54, 32
  %v56 = vpop.permute.xlu0 %55
  %v59 = vunpack.c.l.b16 %v43
  %v60 = vunpack.c.l.b16 %v44
  %v61 = vpack.c.b16 %v60, %v59
  %62 = vrot.lane.b32.xlu0 %v61, 64
  %v63 = vpop.permute.xlu0 %62
  %vm64 = vcmask 261120
  %v67 = vsel %vm64, %v49, %v56
  %vm68 = vcmask 523264
  %v70 = vsel %vm68, %v67, %v63
  %v71 = vld [vmem:[%s2] sm:$0xf]
  %v72 = vld [vmem:[%s2 + $0x4] sm:$0xf]
  %v73 = vld [vmem:[%s2 + $0x8] sm:$0xf]
  %v74 = vld [vmem:[%s2 + $0xc] sm:$0xf]
  %v75 = vld [vmem:[%s2 + $0x10] sm:$0xf]
  %v76 = vld [vmem:[%s2 + $0x14] sm:$0xf]
  %v77 = vld [vmem:[%s2 + $0x18] sm:$0xf]
  %v78 = vld [vmem:[%s2 + $0x1c] sm:$0xf]
  %v79 = vld [vmem:[%s2 + $0x20] sm:$0xf]
  %v80 = vld [vmem:[%s2 + $0x24] sm:$0xf]
  %v81 = vld [vmem:[%s2 + $0x28] sm:$0xf]
  %v82 = vld [vmem:[%s2 + $0x2c] sm:$0xf]
  %v83 = vld [vmem:[%s3] sm:$0x1]
  %v85 = vperm.slane %v83, 0
  %v99 = vunpack.c.l.b16 %v71
  %v100 = vunpack.c.l.b16 %v72
  %v101 = vunpack.c.l.b16 %v73
  %v102 = vunpack.c.l.b16 %v74
  %v103 = vunpack.c.l.b16 %v75
  %v104 = vunpack.c.l.b16 %v76
  %v105 = vunpack.c.l.b16 %v77
  %v106 = vunpack.c.l.b16 %v78
  %v107 = vunpack.c.l.b16 %v79
  %v108 = vunpack.c.l.b16 %v80
  %v109 = vunpack.c.l.b16 %v81
  %v110 = vunpack.c.l.b16 %v82
  %v111 = vpack.c.b16 %v100, %v99
  %v112 = vpack.c.b16 %v102, %v101
  %v113 = vpack.c.b16 %v104, %v103
  %v114 = vpack.c.b16 %v106, %v105
  %v115 = vpack.c.b16 %v108, %v107
  %v116 = vpack.c.b16 %v110, %v109
  %vm123 = vcmask 785408
  %v124 = vsel %vm123, %v70, 0
  %126 = vmatpush.bf16.msra.mxu0 0
  %127 = vmatpush.bf16.msra.mxu0 0
  %128 = vmatpush.bf16.msra.mxu0 %v116
  %129 = vmatpush.bf16.msra.mxu0 %v115
  %130 = vmatpush.bf16.msra.mxu0 %v114
  %131 = vmatpush.bf16.msra.mxu0 %v113
  %132 = vmatpush.bf16.msra.mxu0 %v112
  %133 = vmatpush.bf16.msra.mxu0 %v111
  %134 = vmatmul.bf16.gmra.mxu0 %v124
  %v135 = vpop.f32.mrf.mxu0
  %v136 = vadd.f32 %v85, %v135
  %v137 = vpop.f32.mrf.mxu0
  %v138 = vadd.f32 %v85, %v137
  %139 = vdwg.mxu0
  %v140 = vmul.f32 %v136, 0.5
  %v141 = vmul.f32 %v138, 0.5
  %v142 = vmul.f32 %v136, 0.044715
  %v143 = vmul.f32 %v138, 0.044715
  %v144 = vmul.f32 %v142, %v136
  %v145 = vmul.f32 %v143, %v138
  %v146 = vmul.f32 %v144, %v136
  %v147 = vmul.f32 %v145, %v138
  %v148 = vadd.f32 %v136, %v146
  %v149 = vadd.f32 %v138, %v147
  %v150 = vmul.f32 %v148, 0.7978846
  %v151 = vmul.f32 %v149, 0.7978846
  %v152 = vtanh.pop %v150
  %v153 = vtanh.pop %v151
  %v154 = vadd.f32 %v152, 1.0
  %v155 = vadd.f32 %v153, 1.0
  %v156 = vmul.f32 %v140, %v154
  %v157 = vmul.f32 %v141, %v155
  %v158 = vld [vmem:[%s4] sm:$0x1]
  %v160 = vperm.slane %v158, 0
  %v162 = vmul.f32 %v156, %v160
  %v163 = vmul.f32 %v157, %v160
  %v164 = vsel %vm64, %v162, 0.0
  %165 = vadd.xlane.f32.xlu0 %v164
  %v166 = vpop.xlane.xlu0 %165
  %v167 = vsel %vm64, %v163, 0.0
  %168 = vadd.xlane.f32.xlu0 %v167
  %v169 = vpop.xlane.xlu0 %168
  %s170 = sld [smem:[#allocation2]]
  %v171 = vstv %s170
  %v172 = vadd.f32 %v166, %v171
  %v173 = vadd.f32 %v169, %v171
  %vm174 = vcmask 7168
  %175 = vst.msk [vmem:[%s6] sm:$0xff] %vm174, %v172
  %176 = vst.msk [vmem:[%s6 + $0x8] sm:$0xff] %vm174, %v173
  // Predicated region
  $region26: #{tpu_custom_call.1} parent=0 // pred_check
    _
  $region27: #{tpu_custom_call.1} parent=0 // pred_check_branch
    %178 = sbr.rel (0) target = $region29
  $region28: #{tpu_custom_call.1} parent=0 // pred_region
    _
  $region29: #{tpu_custom_call.1} parent=0 // pred_fallthru
    _
  // Predicated region
  $region30: #{tpu_custom_call.1} parent=0 // pred_check
    _
  $region31: #{tpu_custom_call.1} parent=0 // pred_check_branch
    %180 = sbr.rel (0) target = $region33
  $region32: #{tpu_custom_call.1} parent=0 // pred_region
    _
  $region33: #{tpu_custom_call.1} parent=0 // pred_fallthru
    _

</llo_original>
